<compile_context>
chip_gen: v5e
topology: v5e:2x2
jax: 0.10.0
libtpu: 0.0.40
codegen_flags: <defaults>
</compile_context>

<pallas_src>
import functools

import jax
import jax.numpy as jnp
from jax import lax
from jax.experimental import pallas as pl
from jax.experimental.pallas import tpu as pltpu


# ---------------------------------------------------------------------------
# Tiled linear projections (x @ W [+ b]) with K-axis accumulation.
# ---------------------------------------------------------------------------
def _matmul_kernel(x_ref, w_ref, o_ref, acc_ref):
    @pl.when(pl.program_id(2) == 0)
    def _init():
        acc_ref[...] = jnp.zeros_like(acc_ref)

    acc_ref[...] += jnp.dot(
        x_ref[...], w_ref[...], preferred_element_type=jnp.float32
    )

    @pl.when(pl.program_id(2) == pl.num_programs(2) - 1)
    def _store():
        o_ref[...] = acc_ref[...].astype(o_ref.dtype)


def _matmul_bias_kernel(x_ref, w_ref, b_ref, o_ref, acc_ref):
    @pl.when(pl.program_id(2) == 0)
    def _init():
        acc_ref[...] = jnp.zeros_like(acc_ref)

    acc_ref[...] += jnp.dot(
        x_ref[...], w_ref[...], preferred_element_type=jnp.float32
    )

    @pl.when(pl.program_id(2) == pl.num_programs(2) - 1)
    def _store():
        o_ref[...] = (acc_ref[...] + b_ref[...].astype(jnp.float32)).astype(
            o_ref.dtype
        )


def _pick_tile(size, preferred, align):
    """Largest tile <= preferred that divides `size` and is `align`-aligned.

    Falls back to the full extent (always legal for the last two block dims).
    """
    if size <= preferred:
        return size
    t = (preferred // align) * align
    while t >= align:
        if size % t == 0:
            return t
        t -= align
    return size


def _tiled_linear(x2d, w, bias=None, *, tm_pref=256, tn_pref=256, tk_pref=512):
    """y = x2d @ w (+ bias), tiled + pipelined on TPU."""
    M, K = x2d.shape
    _, Nout = w.shape
    tm = _pick_tile(M, tm_pref, 8)
    tn = _pick_tile(Nout, tn_pref, 128)
    tk = _pick_tile(K, tk_pref, 128)
    grid = (M // tm, Nout // tn, K // tk)

    x_spec = pl.BlockSpec((tm, tk), lambda i, j, k: (i, k))
    w_spec = pl.BlockSpec((tk, tn), lambda i, j, k: (k, j))
    o_spec = pl.BlockSpec((tm, tn), lambda i, j, k: (i, j))
    scratch = [pltpu.VMEM((tm, tn), jnp.float32)]
    cparams = pltpu.CompilerParams(
        dimension_semantics=("parallel", "parallel", "arbitrary")
    )

    if bias is None:
        return pl.pallas_call(
            _matmul_kernel,
            out_shape=jax.ShapeDtypeStruct((M, Nout), x2d.dtype),
            grid=grid,
            in_specs=[x_spec, w_spec],
            out_specs=o_spec,
            scratch_shapes=scratch,
            compiler_params=cparams,
        )(x2d, w)

    b_spec = pl.BlockSpec((1, tn), lambda i, j, k: (0, j))
    return pl.pallas_call(
        _matmul_bias_kernel,
        out_shape=jax.ShapeDtypeStruct((M, Nout), x2d.dtype),
        grid=grid,
        in_specs=[x_spec, w_spec, b_spec],
        out_specs=o_spec,
        scratch_shapes=scratch,
        compiler_params=cparams,
    )(x2d, w, bias)


# ---------------------------------------------------------------------------
# Attention core: one batch per grid step, all heads handled in-kernel.
# Input is the flat qkv activation (B, N, 3*dim); the q/k/v + head split is
# static slicing of the VMEM tile (no HBM transpose).  The output is written
# lane-dense as (B, N, dim) with heads already concatenated.
# ---------------------------------------------------------------------------
def _attn_kernel(qkv_ref, o_ref, attn_ref, *, scale, num_heads, head_dim, dim):
    base_k = dim
    base_v = 2 * dim
    outs = []
    for h in range(num_heads):  # static, unrolled
        lo = h * head_dim
        q = qkv_ref[0, :, lo:lo + head_dim].astype(jnp.float32) * scale
        k = qkv_ref[0, :, base_k + lo:base_k + lo + head_dim].astype(jnp.float32)
        v = qkv_ref[0, :, base_v + lo:base_v + lo + head_dim]

        # q @ k^T without materializing a transposed k tile.
        s = lax.dot_general(
            q, k,
            dimension_numbers=(((1,), (1,)), ((), ())),
            preferred_element_type=jnp.float32,
        )  # (N, N)

        m = jnp.max(s, axis=-1, keepdims=True)
        p = jnp.exp(s - m)
        denom = jnp.sum(p, axis=-1, keepdims=True)
        attn = p * pl.reciprocal(denom, approx=True)

        attn_ref[0, h] = attn.astype(attn_ref.dtype)

        out_h = jnp.dot(
            attn.astype(v.dtype), v, preferred_element_type=jnp.float32
        )  # (N, head_dim)
        outs.append(out_h)

    # Single unmasked store of the lane-dense (N, dim) tile.
    o_ref[0] = jnp.concatenate(outs, axis=-1).astype(o_ref.dtype)


def attention_forward(x, params, num_heads):
    """Pallas implementation of Attention.forward. Returns (x_out, attn)."""
    B, N, C = x.shape
    w_qkv = params["w_qkv"]      # (C, 3*dim)
    w_proj = params["w_proj"]    # (dim, dim)
    b_proj = params["b_proj"]    # (1, dim)
    dim = w_proj.shape[0]
    head_dim = dim // num_heads
    scale = head_dim ** (-0.5)

    # ---- qkv projection (no bias; qkv_bias=False default) ----
    qkv = _tiled_linear(x.reshape(B * N, C), w_qkv)          # (B*N, 3*dim)
    qkv = qkv.reshape(B, N, 3 * dim)                         # free reshape

    # ---- scaled-dot-product attention, all heads per batch step ----
    out, attn = pl.pallas_call(
        functools.partial(
            _attn_kernel,
            scale=scale,
            num_heads=num_heads,
            head_dim=head_dim,
            dim=dim,
        ),
        out_shape=(
            jax.ShapeDtypeStruct((B, N, dim), x.dtype),
            jax.ShapeDtypeStruct((B, num_heads, N, N), x.dtype),
        ),
        grid=(B,),
        in_specs=[pl.BlockSpec((1, N, 3 * dim), lambda b: (b, 0, 0))],
        out_specs=(
            pl.BlockSpec((1, N, dim), lambda b: (b, 0, 0)),
            pl.BlockSpec((1, num_heads, N, N), lambda b: (b, 0, 0, 0)),
        ),
        compiler_params=pltpu.CompilerParams(
            dimension_semantics=("parallel",)
        ),
    )(qkv)

    # ---- output projection (with bias); out is already (B, N, dim) ----
    y = _tiled_linear(out.reshape(B * N, dim), w_proj, b_proj)
    return y.reshape(B, N, dim), attn


def _reference_forward(x, params, num_heads):
    """Pure-JAX reference for correctness checking."""
    B, N, C = x.shape
    dim = params["w_proj"].shape[0]
    head_dim = dim // num_heads
    scale = head_dim ** (-0.5)
    qkv = x.reshape(B * N, C) @ params["w_qkv"]
    qkv = qkv.reshape(B, N, 3, num_heads, head_dim).transpose(2, 0, 3, 1, 4)
    q, k, v = qkv[0], qkv[1], qkv[2]
    s = jnp.einsum("bhqd,bhkd->bhqk", q, k) * scale
    attn = jax.nn.softmax(s, axis=-1)
    out = jnp.einsum("bhqk,bhkd->bhqd", attn, v)
    out = out.transpose(0, 2, 1, 3).reshape(B * N, dim)
    y = out @ params["w_proj"] + params["b_proj"]
    return y.reshape(B, N, dim), attn


if __name__ == "__main__":
    B, N, in_dim, dim, num_heads = 2, 8, 32, 32, 8

    key = jax.random.PRNGKey(0)
    k1, k2, k3, k4 = jax.random.split(key, 4)
    x = jax.random.normal(k1, (B, N, in_dim), jnp.float32)
    params = {
        "w_qkv": 0.05 * jax.random.normal(k2, (in_dim, 3 * dim), jnp.float32),
        "w_proj": 0.05 * jax.random.normal(k3, (dim, dim), jnp.float32),
        "b_proj": 0.05 * jax.random.normal(k4, (1, dim), jnp.float32),
    }

    y, attn = attention_forward(x, params, num_heads)
    jax.block_until_ready((y, attn))

    y_exp, attn_exp = _reference_forward(x, params, num_heads)
    assert y.shape == (B, N, dim) and attn.shape == (B, num_heads, N, N)
    # Slightly relaxed tolerance: softmax denominator uses the approximate
    # EUP reciprocal (relative error << 1e-2).
    assert jnp.allclose(y, y_exp, rtol=1e-2, atol=2e-3), float(
        jnp.max(jnp.abs(y - y_exp))
    )
    assert jnp.allclose(attn, attn_exp, rtol=1e-2, atol=2e-3), float(
        jnp.max(jnp.abs(attn - attn_exp))
    )

    print("KERNEL_OK")
</pallas_src>

<mosaic_0001>
module attributes {stable_mosaic.version = 11 : i64} {
  func.func @_matmul_kernel(%arg0: i32, %arg1: i32, %arg2: i32, %arg3: memref<16x32xf32, #tpu.memory_space<vmem>>, %arg4: memref<32x96xf32, #tpu.memory_space<vmem>>, %arg5: memref<16x96xf32, #tpu.memory_space<vmem>>, %arg6: memref<16x96xf32, #tpu.memory_space<vmem>>) attributes {dimension_semantics = [#tpu.dimension_semantics<parallel>, #tpu.dimension_semantics<parallel>, #tpu.dimension_semantics<arbitrary>], iteration_bounds = array<i64: 1, 1, 1>, scalar_prefetch = 0 : i64, scratch_operands = 1 : i64, tpu.core_type = #tpu.core_type<tc>, window_params = [{transform_indices = @transform_0, window_bounds = array<i64: 16, 32>}, {transform_indices = @transform_1, window_bounds = array<i64: 32, 96>}, {transform_indices = @transform_2, window_bounds = array<i64: 16, 96>}]} {
    %c0_i32 = arith.constant 0 : i32
    %0 = arith.cmpi eq, %arg2, %c0_i32 : i32
    %1 = arith.extui %0 : i1 to i32
    %c0_i32_0 = arith.constant 0 : i32
    %2 = arith.cmpi ne, %1, %c0_i32_0 : i32
    scf.if %2 {
      %cst_10 = arith.constant 0.000000e+00 : f32
      %12 = vector.broadcast %cst_10 : f32 to vector<16x96xf32>
      %c0_11 = arith.constant 0 : index
      %c0_12 = arith.constant 0 : index
      %13 = vector.load %arg6[%c0_11, %c0_12] : memref<16x96xf32, #tpu.memory_space<vmem>>, vector<16x96xf32>
      tpu.vector_store %arg6[%c0_11, %c0_12], %12 {strides = array<i32>} : memref<16x96xf32, #tpu.memory_space<vmem>>, vector<16x96xf32>,
    } else {
    }
    %c0 = arith.constant 0 : index
    %c0_1 = arith.constant 0 : index
    %3 = vector.load %arg6[%c0, %c0_1] : memref<16x96xf32, #tpu.memory_space<vmem>>, vector<16x96xf32>
    %c0_2 = arith.constant 0 : index
    %c0_3 = arith.constant 0 : index
    %4 = vector.load %arg3[%c0_2, %c0_3] : memref<16x32xf32, #tpu.memory_space<vmem>>, vector<16x32xf32>
    %c0_4 = arith.constant 0 : index
    %c0_5 = arith.constant 0 : index
    %5 = vector.load %arg4[%c0_4, %c0_5] : memref<32x96xf32, #tpu.memory_space<vmem>>, vector<32x96xf32>
    %cst = arith.constant dense<0.000000e+00> : vector<16x96xf32>
    %6 = tpu.matmul %4, %5, %cst {dimension_numbers = #tpu.dot_dimension_numbers<[1], [0], [0], [1], [0, 0, 1, 1], [], []>} : vector<16x32xf32>, vector<32x96xf32>, vector<16x96xf32> -> vector<16x96xf32>
    %7 = arith.addf %3, %6 : vector<16x96xf32>
    %c0_6 = arith.constant 0 : index
    %c0_7 = arith.constant 0 : index
    %8 = vector.load %arg6[%c0_6, %c0_7] : memref<16x96xf32, #tpu.memory_space<vmem>>, vector<16x96xf32>
    tpu.vector_store %arg6[%c0_6, %c0_7], %7 {strides = array<i32>} : memref<16x96xf32, #tpu.memory_space<vmem>>, vector<16x96xf32>,
    %c0_i32_8 = arith.constant 0 : i32
    %9 = arith.cmpi eq, %arg2, %c0_i32_8 : i32
    %10 = arith.extui %9 : i1 to i32
    %c0_i32_9 = arith.constant 0 : i32
    %11 = arith.cmpi ne, %10, %c0_i32_9 : i32
    scf.if %11 {
      %c0_10 = arith.constant 0 : index
      %c0_11 = arith.constant 0 : index
      %12 = vector.load %arg6[%c0_10, %c0_11] : memref<16x96xf32, #tpu.memory_space<vmem>>, vector<16x96xf32>
      %c0_12 = arith.constant 0 : index
      %c0_13 = arith.constant 0 : index
      %13 = vector.load %arg5[%c0_12, %c0_13] : memref<16x96xf32, #tpu.memory_space<vmem>>, vector<16x96xf32>
      tpu.vector_store %arg5[%c0_12, %c0_13], %12 {strides = array<i32>} : memref<16x96xf32, #tpu.memory_space<vmem>>, vector<16x96xf32>,
    } else {
    }
    return
  }
  func.func @transform_0(%arg0: i32, %arg1: i32, %arg2: i32) -> (i32, i32) {
    %c0_i32 = arith.constant 0 : i32
    return %arg0, %arg2 : i32, i32
  }
  func.func @transform_1(%arg0: i32, %arg1: i32, %arg2: i32) -> (i32, i32) {
    %c0_i32 = arith.constant 0 : i32
    return %arg2, %arg1 : i32, i32
  }
  func.func @transform_2(%arg0: i32, %arg1: i32, %arg2: i32) -> (i32, i32) {
    %c0_i32 = arith.constant 0 : i32
    return %arg0, %arg1 : i32, i32
  }
}

</mosaic_0001>

<llo_original>
// kernel: tpu_custom_call.1
$region0: #{tpu_custom_call.1}
  #allocation0 [shape = 'u32[]', space=smem, size = 0x4, offset = 0x4, fixed_abs, tag = 'smem constant byte address 0x4 - core index']
  #allocation1 [shape = 'u32[72,128]{1,0:T(1,128)}', space=vmem, size = 0x9000, scoped, tag = 'internal scratch']
  #allocation2 [shape = 'f32[16,96]{1,0:T(8,128)}', space=vmem, size = 0x2000, scoped, tag = 'scratch operand']
  %s0 = inlined_call_operand.hbm [shape: f32[16,32], index: 0, kind: input, shape index: {}]
  %s1 = inlined_call_operand.hbm [shape: f32[32,96], index: 1, kind: input, shape index: {}]
  %s2 = inlined_call_operand.hbm [shape: f32[16,96], index: 2, kind: output, shape index: {}]
  %s3 = sld [smem:[#allocation0]]
  $region34: #{tpu_custom_call.1} parent=0
    _
  %s5 = ssub.s32 1, %s3
  %s6 = scalar_select 0, %s5, %s3
  $region1: #{tpu_custom_call.1} parent=0
    #allocation3 [shape = 'u8[8192]{0}', space=vmem, size = 0x2000, scoped, tag = 'input window, operand 0, single buffered']
    #allocation4 [shape = 's32[1]{0}', space=sflag, size = 0x4, scoped, tag = 'scoped memory for tpu_custom_call.1']
    #allocation5 [shape = 's32[1]{0}', space=sflag, size = 0x4, scoped, tag = 'scoped memory for tpu_custom_call.1']
    #allocation6 [shape = 'u8[16384]{0}', space=vmem, size = 0x4000, scoped, tag = 'input window, operand 1, single buffered']
    #allocation7 [shape = 's32[1]{0}', space=sflag, size = 0x4, scoped, tag = 'scoped memory for tpu_custom_call.1']
    #allocation8 [shape = 'u8[8192]{0}', space=vmem, size = 0x2000, scoped, tag = 'output window, operand 0, single buffered']
    %7 = vsyncpa [#allocation4], 0
    %8 = vsyncpa [#allocation7], 0
    %9 = vsyncpa [#allocation5], 0
    // Predicated region
    $region2: #{tpu_custom_call.1} parent=1 // pred_check
      _
    $region3: #{tpu_custom_call.1} parent=1 // pred_check_branch
      %11 = sbr.rel (0) target = $region5
    $region4: #{tpu_custom_call.1} parent=1 // pred_region
      %13 = vsyncadd [#allocation4], 0
      %s14 = sshll.u32 %s0, 4
      %s15 = int_to_ptr.hbm [resolvable:$true] %s14
      %s16 = sshll.u32 [#allocation3], 4
      %s17 = int_to_ptr.vmem [resolvable:$true] %s16
      %22 = dma.hbm_to_vmem [thread:$0]  %s15, 256, %s17, [#allocation4], 128, 128, 8
    $region5: #{tpu_custom_call.1} parent=1 // pred_fallthru
      _
    // Predicated region
    $region6: #{tpu_custom_call.1} parent=1 // pred_check
      _
    $region7: #{tpu_custom_call.1} parent=1 // pred_check_branch
      %24 = sbr.rel (0) target = $region9
    $region8: #{tpu_custom_call.1} parent=1 // pred_region
      %26 = vsyncadd [#allocation7], 0
      %s27 = sshll.u32 %s1, 4
      %s28 = int_to_ptr.hbm [resolvable:$true] %s27
      %s29 = sshll.u32 [#allocation6], 4
      %s30 = int_to_ptr.vmem [resolvable:$true] %s29
      %35 = dma.hbm_to_vmem [thread:$0]  %s28, 512, %s30, [#allocation7], 128, 128, 8
    $region9: #{tpu_custom_call.1} parent=1 // pred_fallthru
      _
    // Predicated region
    $region10: #{tpu_custom_call.1} parent=1 // pred_check
      _
    $region11: #{tpu_custom_call.1} parent=1 // pred_check_branch
      %37 = sbr.rel (0) target = $region13
    $region12: #{tpu_custom_call.1} parent=1 // pred_region
      %39 = dma.done [#allocation4], 256
    $region13: #{tpu_custom_call.1} parent=1 // pred_fallthru
      _
    // Predicated region
    $region14: #{tpu_custom_call.1} parent=1 // pred_check
      _
    $region15: #{tpu_custom_call.1} parent=1 // pred_check_branch
      %41 = sbr.rel (0) target = $region17
    $region16: #{tpu_custom_call.1} parent=1 // pred_region
      %43 = dma.done [#allocation7], 512
    $region17: #{tpu_custom_call.1} parent=1 // pred_fallthru
      _
    %p44 = scmp.eq.s32.totalorder 0, 0
    // Predicated region
    $region18: #{tpu_custom_call.1} parent=1 // pred_check
      %p45 = pneg %p44
    $region19: #{tpu_custom_call.1} parent=1 // pred_check_branch
      %47 = sbr.rel (%p45) target = $region21
    $region20: #{tpu_custom_call.1} parent=1 // pred_region
      %vm48 = vcmask 785408
      %49 = vst.msk [vmem:[#allocation2] sm:$0xff] %vm48, 0.0
      %50 = vst.msk [vmem:[#allocation2 + $0x8] sm:$0xff] %vm48, 0.0
    $region21: #{tpu_custom_call.1} parent=1 // pred_fallthru
      _
    %v51 = vld [vmem:[#allocation2] sm:$0xff]
    %v52 = vld [vmem:[#allocation2 + $0x8] sm:$0xff]
    %v53 = vld [vmem:[#allocation3] sm:$0xff]
    %v54 = vld [vmem:[#allocation3 + $0x8] sm:$0xff]
    %v55 = vld [vmem:[#allocation6] sm:$0xff]
    %v56 = vld [vmem:[#allocation6 + $0x8] sm:$0xff]
    %v57 = vld [vmem:[#allocation6 + $0x10] sm:$0xff]
    %v58 = vld [vmem:[#allocation6 + $0x18] sm:$0xff]
    %vm59 = vcmask 261120
    %v61 = vsel %vm59, %v53, 0
    %v64 = vsel %vm59, %v54, 0
    %66 = vmatpush.msra.mxu0 0.0
    %67 = vmatpush.msra.mxu0 0.0
    %68 = vmatpush.msra.mxu0 0.0
    %69 = vmatpush.msra.mxu0 0.0
    %70 = vmatpush.msra.mxu0 0.0
    %71 = vmatpush.msra.mxu0 0.0
    %72 = vmatpush.msra.mxu0 0.0
    %73 = vmatpush.msra.mxu0 0.0
    %74 = vmatpush.msra.mxu0 0.0
    %75 = vmatpush.msra.mxu0 0.0
    %76 = vmatpush.msra.mxu0 0.0
    %77 = vmatpush.msra.mxu0 0.0
    %78 = vmatpush.msra.mxu0 %v58
    %79 = vmatpush.msra.mxu0 %v57
    %80 = vmatpush.msra.mxu0 %v56
    %81 = vmatpush.msra.mxu0 %v55
    %82 = vmatmul.f32.gmra.mxu0 %v61
    %v83 = vpop.f32.mrf.mxu0
    %v84 = vadd.f32 0.0, %v83
    %85 = vmatmul.f32.gmra.mxu0 %v64
    %v86 = vpop.f32.mrf.mxu0
    %v87 = vadd.f32 0.0, %v86
    %88 = vdwg.mxu0
    %v89 = vadd.f32 %v51, %v84
    %v90 = vadd.f32 %v52, %v87
    %vm91 = vcmask 785408
    %92 = vst.msk [vmem:[#allocation2] sm:$0xff] %vm91, %v89
    %93 = vst.msk [vmem:[#allocation2 + $0x8] sm:$0xff] %vm91, %v90
    // Predicated region
    $region22: #{tpu_custom_call.1} parent=1 // pred_check
      %p94 = pneg %p44
    $region23: #{tpu_custom_call.1} parent=1 // pred_check_branch
      %96 = sbr.rel (%p94) target = $region25
    $region24: #{tpu_custom_call.1} parent=1 // pred_region
      %v97 = vld [vmem:[#allocation2] sm:$0xff]
      %v98 = vld [vmem:[#allocation2 + $0x8] sm:$0xff]
      %99 = vst.msk [vmem:[#allocation8] sm:$0xff] %vm91, %v97
      %100 = vst.msk [vmem:[#allocation8 + $0x8] sm:$0xff] %vm91, %v98
    $region25: #{tpu_custom_call.1} parent=1 // pred_fallthru
      _
    // Predicated region
    $region26: #{tpu_custom_call.1} parent=1 // pred_check
      _
    $region27: #{tpu_custom_call.1} parent=1 // pred_check_branch
      %102 = sbr.rel (0) target = $region29
    $region28: #{tpu_custom_call.1} parent=1 // pred_region
      %104 = vsyncadd [#allocation5], 0
      %s105 = sshll.u32 [#allocation8], 4
      %s106 = int_to_ptr.vmem [resolvable:$true] %s105
      %s107 = sshll.u32 %s2, 4
      %s108 = int_to_ptr.hbm [resolvable:$true] %s107
      %113 = dma.vmem_to_hbm [thread:$0]  %s106, 256, %s108, [#allocation5], 128, 128, 8
    $region29: #{tpu_custom_call.1} parent=1 // pred_fallthru
      _
    // Predicated region
    $region30: #{tpu_custom_call.1} parent=1 // pred_check
      _
    $region31: #{tpu_custom_call.1} parent=1 // pred_check_branch
      %115 = sbr.rel (0) target = $region33
    $region32: #{tpu_custom_call.1} parent=1 // pred_region
      %117 = dma.done [#allocation5], 256
    $region33: #{tpu_custom_call.1} parent=1 // pred_fallthru
      _
    %118 = vsyncpa [#allocation4], 1
    %119 = vsyncpa [#allocation7], 1
    %120 = vsyncpa [#allocation5], 1

</llo_original>
